<compile_context>
chip_gen: v5e
topology: v5e:2x2
jax: 0.10.0
libtpu: 0.0.40
codegen_flags: <defaults>
</compile_context>

<pallas_src>
import functools

import jax
import jax.numpy as jnp
from jax.experimental import pallas as pl
from jax.experimental.pallas import tpu as pltpu


def _round_up(x, m):
    return ((x + m - 1) // m) * m


def mlp_kernel(x_ref, w1_ref, b1_ref, w2_ref, b2_ref, w3_ref, b3_ref, out_ref):
    w1 = w1_ref[...]
    # Downcast x in vregs for the bf16 fast path (no-op when weights are f32).
    x = x_ref[...].astype(w1.dtype)

    # fc1 + ReLU (dropout == identity in eval mode). f32 MXU accumulation;
    # bias add / ReLU in f32 (native VPU width on all generations incl. v5e).
    h1 = jnp.dot(x, w1, preferred_element_type=jnp.float32) + b1_ref[...]
    h1 = jnp.maximum(h1, 0.0)

    # fc2 + ReLU
    w2 = w2_ref[...]
    h2 = jnp.dot(h1.astype(w2.dtype), w2, preferred_element_type=jnp.float32) + b2_ref[...]
    h2 = jnp.maximum(h2, 0.0)

    # fc3 (no activation). Output block's last dim is the full (unpadded) out_dim.
    w3 = w3_ref[...]
    out = jnp.dot(h2.astype(w3.dtype), w3, preferred_element_type=jnp.float32) + b3_ref[...]
    out_ref[...] = out.astype(out_ref.dtype)


def prepare_params(params, compute_dtype=jnp.float32):
    """One-time param prep: pad hidden dims to multiples of 128 lanes and cast weights.

    Zero padding keeps results exactly unchanged (padded h1/h2 activations are
    relu(0) == 0 and their fc rows are zero). Biases stay f32.
    """
    w1, b1, w2, b2, w3, b3 = params
    h1, h2 = w1.shape[1], w2.shape[1]
    h1p = _round_up(h1, 128)
    h2p = _round_up(h2, 128)
    w1p = jnp.pad(w1, ((0, 0), (0, h1p - h1))).astype(compute_dtype)
    b1p = jnp.pad(b1, ((0, 0), (0, h1p - h1))).astype(jnp.float32)
    w2p = jnp.pad(w2, ((0, h1p - h1), (0, h2p - h2))).astype(compute_dtype)
    b2p = jnp.pad(b2, ((0, 0), (0, h2p - h2))).astype(jnp.float32)
    w3p = jnp.pad(w3, ((0, h2p - h2), (0, 0))).astype(compute_dtype)
    b3p = b3.astype(jnp.float32)
    return (w1p, b1p, w2p, b2p, w3p, b3p)


@functools.partial(jax.jit, static_argnames=("tile_b",))
def mlp_forward(x, prepared, *, tile_b=2048):
    """Eval-mode MLP forward.

    x: (B, input_dim) f32 (never padded/cast in the wrapper).
    prepared: output of prepare_params(); weight dtype selects the compute path
    (f32 exact, or bf16 MXU fast path with f32 accumulation and bf16 output).
    """
    w1, b1, w2, b2, w3, b3 = prepared
    B, in_dim = x.shape
    h1_dim = w1.shape[1]
    h2_dim = w2.shape[1]
    out_dim = w3.shape[1]
    out_dtype = w1.dtype  # f32 path -> f32 out; bf16 path -> bf16 out (halved write stream)

    # Balanced batch tiles (multiple of 8 sublanes). Ragged last tile is handled by
    # Pallas (masked output writeback); rows are independent so garbage pad rows are safe.
    num_tiles = max(1, -(-B // tile_b))
    tb = _round_up(-(-B // num_tiles), 8)
    grid = (pl.cdiv(B, tb),)

    resident = lambda shape: pl.BlockSpec(shape, lambda i: (0, 0))

    return pl.pallas_call(
        mlp_kernel,
        out_shape=jax.ShapeDtypeStruct((B, out_dim), out_dtype),
        grid=grid,
        in_specs=[
            pl.BlockSpec((tb, in_dim), lambda i: (i, 0)),   # x tile (pipelined); K=60 full-extent
            resident((in_dim, h1_dim)),                     # w1 (VMEM-resident)
            resident((1, h1_dim)),                          # b1
            resident((h1_dim, h2_dim)),                     # w2
            resident((1, h2_dim)),                          # b2
            resident((h2_dim, out_dim)),                    # w3
            resident((1, out_dim)),                         # b3
        ],
        out_specs=pl.BlockSpec((tb, out_dim), lambda i: (i, 0)),  # full-extent out_dim, no padding
        compiler_params=pltpu.CompilerParams(
            dimension_semantics=("parallel",),
            vmem_limit_bytes=32 * 1024 * 1024,
        ),
    )(x, w1, b1, w2, b2, w3, b3)


def init_params(key, input_dim=60, hidden_dims=(128, 64), output_dim=10):
    """Deterministic PyTorch-Linear-style init: U(-1/sqrt(fan_in), 1/sqrt(fan_in))."""
    dims = [input_dim, hidden_dims[0], hidden_dims[1], output_dim]
    params = []
    keys = jax.random.split(key, 2 * (len(dims) - 1))
    for i in range(len(dims) - 1):
        fan_in, fan_out = dims[i], dims[i + 1]
        bound = 1.0 / jnp.sqrt(jnp.float32(fan_in))
        w = jax.random.uniform(keys[2 * i], (fan_in, fan_out),
                               minval=-bound, maxval=bound, dtype=jnp.float32)
        b = jax.random.uniform(keys[2 * i + 1], (1, fan_out),
                               minval=-bound, maxval=bound, dtype=jnp.float32)
        params += [w, b]
    return tuple(params)


if __name__ == "__main__":
    key = jax.random.PRNGKey(0)
    k_x, k_p, k_x2 = jax.random.split(key, 3)

    batch, input_dim = 2, 60
    x = jax.random.normal(k_x, (batch, input_dim), dtype=jnp.float32)
    params = init_params(k_p, input_dim=input_dim, hidden_dims=(128, 64), output_dim=10)

    # Reference (eval-mode forward) in plain JAX.
    w1, b1, w2, b2, w3, b3 = params

    def ref_fwd(xx):
        h = jnp.maximum(xx @ w1 + b1, 0.0)
        h = jnp.maximum(h @ w2 + b2, 0.0)
        return h @ w3 + b3

    # f32 path: tight check.
    prepared_f32 = prepare_params(params, compute_dtype=jnp.float32)
    out = mlp_forward(x, prepared_f32)
    jax.block_until_ready(out)
    assert out.shape == (batch, 10)
    assert out.dtype == jnp.float32
    assert jnp.allclose(out, ref_fwd(x), atol=1e-5, rtol=1e-5)

    # Multi-tile path with a ragged last batch tile (exercises grid > 1 + masked writeback).
    x2 = jax.random.normal(k_x2, (300, input_dim), dtype=jnp.float32)
    out2 = mlp_forward(x2, prepared_f32, tile_b=128)
    jax.block_until_ready(out2)
    assert out2.shape == (300, 10)
    assert jnp.allclose(out2, ref_fwd(x2), atol=1e-5, rtol=1e-5)

    # bf16 fast path (v6e/v7x): f32 x streamed in, downcast in vregs, bf16 output; looser check.
    prepared_bf16 = prepare_params(params, compute_dtype=jnp.bfloat16)
    out_bf16 = mlp_forward(x, prepared_bf16)
    jax.block_until_ready(out_bf16)
    assert out_bf16.shape == (batch, 10)
    assert out_bf16.dtype == jnp.bfloat16
    assert jnp.allclose(out_bf16.astype(jnp.float32), ref_fwd(x), atol=5e-2, rtol=5e-2)

    print("KERNEL_OK")
</pallas_src>

<mosaic_0001>
module attributes {stable_mosaic.version = 11 : i64} {
  func.func @mlp_kernel(%arg0: i32, %arg1: memref<8x60xf32, #tpu.memory_space<vmem>>, %arg2: memref<60x128xf32, #tpu.memory_space<vmem>>, %arg3: memref<1x128xf32, #tpu.memory_space<vmem>>, %arg4: memref<128x128xf32, #tpu.memory_space<vmem>>, %arg5: memref<1x128xf32, #tpu.memory_space<vmem>>, %arg6: memref<128x10xf32, #tpu.memory_space<vmem>>, %arg7: memref<1x10xf32, #tpu.memory_space<vmem>>, %arg8: memref<8x10xf32, #tpu.memory_space<vmem>>) attributes {dimension_semantics = [#tpu.dimension_semantics<parallel>], iteration_bounds = array<i64: 1>, scalar_prefetch = 0 : i64, scratch_operands = 0 : i64, tpu.core_type = #tpu.core_type<tc>, window_params = [{transform_indices = @transform_0, window_bounds = array<i64: 8, 60>}, {pipeline_mode = #tpu.pipeline_mode<synchronous>, transform_indices = @transform_1, window_bounds = array<i64: 60, 128>}, {pipeline_mode = #tpu.pipeline_mode<synchronous>, transform_indices = @transform_2, window_bounds = array<i64: 1, 128>}, {pipeline_mode = #tpu.pipeline_mode<synchronous>, transform_indices = @transform_3, window_bounds = array<i64: 128, 128>}, {pipeline_mode = #tpu.pipeline_mode<synchronous>, transform_indices = @transform_4, window_bounds = array<i64: 1, 128>}, {pipeline_mode = #tpu.pipeline_mode<synchronous>, transform_indices = @transform_5, window_bounds = array<i64: 128, 10>}, {pipeline_mode = #tpu.pipeline_mode<synchronous>, transform_indices = @transform_6, window_bounds = array<i64: 1, 10>}, {transform_indices = @transform_7, window_bounds = array<i64: 8, 10>}]} {
    %c0 = arith.constant 0 : index
    %c0_0 = arith.constant 0 : index
    %0 = vector.load %arg2[%c0, %c0_0] : memref<60x128xf32, #tpu.memory_space<vmem>>, vector<60x128xf32>
    %c0_1 = arith.constant 0 : index
    %c0_2 = arith.constant 0 : index
    %1 = vector.load %arg1[%c0_1, %c0_2] : memref<8x60xf32, #tpu.memory_space<vmem>>, vector<8x60xf32>
    %cst = arith.constant dense<0.000000e+00> : vector<8x128xf32>
    %2 = tpu.matmul %1, %0, %cst {dimension_numbers = #tpu.dot_dimension_numbers<[1], [0], [0], [1], [0, 0, 1, 1], [], []>} : vector<8x60xf32>, vector<60x128xf32>, vector<8x128xf32> -> vector<8x128xf32>
    %c0_3 = arith.constant 0 : index
    %c0_4 = arith.constant 0 : index
    %3 = vector.load %arg3[%c0_3, %c0_4] : memref<1x128xf32, #tpu.memory_space<vmem>>, vector<1x128xf32>
    %4 = vector.broadcast %3 : vector<1x128xf32> to vector<8x128xf32>
    %5 = arith.addf %2, %4 : vector<8x128xf32>
    %cst_5 = arith.constant 0.000000e+00 : f32
    %6 = vector.broadcast %cst_5 : f32 to vector<8x128xf32>
    %7 = arith.maximumf %5, %6 : vector<8x128xf32>
    %c0_6 = arith.constant 0 : index
    %c0_7 = arith.constant 0 : index
    %8 = vector.load %arg4[%c0_6, %c0_7] : memref<128x128xf32, #tpu.memory_space<vmem>>, vector<128x128xf32>
    %cst_8 = arith.constant dense<0.000000e+00> : vector<8x128xf32>
    %9 = tpu.matmul %7, %8, %cst_8 {dimension_numbers = #tpu.dot_dimension_numbers<[1], [0], [0], [1], [0, 0, 1, 1], [], []>} : vector<8x128xf32>, vector<128x128xf32>, vector<8x128xf32> -> vector<8x128xf32>
    %c0_9 = arith.constant 0 : index
    %c0_10 = arith.constant 0 : index
    %10 = vector.load %arg5[%c0_9, %c0_10] : memref<1x128xf32, #tpu.memory_space<vmem>>, vector<1x128xf32>
    %11 = vector.broadcast %10 : vector<1x128xf32> to vector<8x128xf32>
    %12 = arith.addf %9, %11 : vector<8x128xf32>
    %cst_11 = arith.constant 0.000000e+00 : f32
    %13 = vector.broadcast %cst_11 : f32 to vector<8x128xf32>
    %14 = arith.maximumf %12, %13 : vector<8x128xf32>
    %c0_12 = arith.constant 0 : index
    %c0_13 = arith.constant 0 : index
    %15 = vector.load %arg6[%c0_12, %c0_13] : memref<128x10xf32, #tpu.memory_space<vmem>>, vector<128x10xf32>
    %cst_14 = arith.constant dense<0.000000e+00> : vector<8x10xf32>
    %16 = tpu.matmul %14, %15, %cst_14 {dimension_numbers = #tpu.dot_dimension_numbers<[1], [0], [0], [1], [0, 0, 1, 1], [], []>} : vector<8x128xf32>, vector<128x10xf32>, vector<8x10xf32> -> vector<8x10xf32>
    %c0_15 = arith.constant 0 : index
    %c0_16 = arith.constant 0 : index
    %17 = vector.load %arg7[%c0_15, %c0_16] : memref<1x10xf32, #tpu.memory_space<vmem>>, vector<1x10xf32>
    %18 = vector.broadcast %17 : vector<1x10xf32> to vector<8x10xf32>
    %19 = arith.addf %16, %18 : vector<8x10xf32>
    %c0_17 = arith.constant 0 : index
    %c0_18 = arith.constant 0 : index
    %20 = vector.load %arg8[%c0_17, %c0_18] : memref<8x10xf32, #tpu.memory_space<vmem>>, vector<8x10xf32>
    tpu.vector_store %arg8[%c0_17, %c0_18], %19 {strides = array<i32>} : memref<8x10xf32, #tpu.memory_space<vmem>>, vector<8x10xf32>,
    return
  }
  func.func @transform_0(%arg0: i32) -> (i32, i32) {
    %c0_i32 = arith.constant 0 : i32
    %c0_i32_0 = arith.constant 0 : i32
    return %arg0, %c0_i32 : i32, i32
  }
  func.func @transform_1(%arg0: i32) -> (i32, i32) {
    %c0_i32 = arith.constant 0 : i32
    %c0_i32_0 = arith.constant 0 : i32
    %c0_i32_1 = arith.constant 0 : i32
    return %c0_i32, %c0_i32_0 : i32, i32
  }
  func.func @transform_2(%arg0: i32) -> (i32, i32) {
    %c0_i32 = arith.constant 0 : i32
    %c0_i32_0 = arith.constant 0 : i32
    %c0_i32_1 = arith.constant 0 : i32
    return %c0_i32, %c0_i32_0 : i32, i32
  }
  func.func @transform_3(%arg0: i32) -> (i32, i32) {
    %c0_i32 = arith.constant 0 : i32
    %c0_i32_0 = arith.constant 0 : i32
    %c0_i32_1 = arith.constant 0 : i32
    return %c0_i32, %c0_i32_0 : i32, i32
  }
  func.func @transform_4(%arg0: i32) -> (i32, i32) {
    %c0_i32 = arith.constant 0 : i32
    %c0_i32_0 = arith.constant 0 : i32
    %c0_i32_1 = arith.constant 0 : i32
    return %c0_i32, %c0_i32_0 : i32, i32
  }
  func.func @transform_5(%arg0: i32) -> (i32, i32) {
    %c0_i32 = arith.constant 0 : i32
    %c0_i32_0 = arith.constant 0 : i32
    %c0_i32_1 = arith.constant 0 : i32
    return %c0_i32, %c0_i32_0 : i32, i32
  }
  func.func @transform_6(%arg0: i32) -> (i32, i32) {
    %c0_i32 = arith.constant 0 : i32
    %c0_i32_0 = arith.constant 0 : i32
    %c0_i32_1 = arith.constant 0 : i32
    return %c0_i32, %c0_i32_0 : i32, i32
  }
  func.func @transform_7(%arg0: i32) -> (i32, i32) {
    %c0_i32 = arith.constant 0 : i32
    %c0_i32_0 = arith.constant 0 : i32
    return %arg0, %c0_i32 : i32, i32
  }
}

</mosaic_0001>

<llo_original>
// kernel: mlp_forward.1
$region0: #{mlp_forward.1}
  #allocation0 [shape = 'u32[]', space=smem, size = 0x4, offset = 0x4, fixed_abs, tag = 'smem constant byte address 0x4 - core index']
  #allocation1 [shape = 'u32[72,128]{1,0:T(1,128)}', space=vmem, size = 0x9000, scoped, tag = 'internal scratch']
  %s0 = inlined_call_operand.vmem [shape: f32[2,60], index: 0, kind: input, shape index: {}]
  %s1 = inlined_call_operand.hbm [shape: f32[60,128], index: 1, kind: input, shape index: {}]
  %s2 = inlined_call_operand.vmem [shape: f32[1,128], index: 2, kind: input, shape index: {}]
  %s3 = inlined_call_operand.vmem [shape: f32[128,128], index: 3, kind: input, shape index: {}]
  %s4 = inlined_call_operand.vmem [shape: f32[1,128], index: 4, kind: input, shape index: {}]
  %s5 = inlined_call_operand.vmem [shape: f32[128,10], index: 5, kind: input, shape index: {}]
  %s6 = inlined_call_operand.vmem [shape: f32[1,10], index: 6, kind: input, shape index: {}]
  %s7 = inlined_call_operand.hbm [shape: f32[2,10], index: 7, kind: output, shape index: {}]
  %s8 = sld [smem:[#allocation0]]
  $region42: #{mlp_forward.1} parent=0
    _
  %s10 = ssub.s32 1, %s8
  %s11 = scalar_select 0, %s10, %s8
  $region1: #{mlp_forward.1} parent=0
    #allocation2 [shape = 'u8[32768]{0}', space=vmem, size = 0x8000, scoped, tag = 'input window, operand 1, single buffered']
    #allocation3 [shape = 's32[1]{0}', space=sflag, size = 0x4, scoped, tag = 'scoped memory for mlp_forward.1']
    #allocation4 [shape = 's32[1]{0}', space=sflag, size = 0x4, scoped, tag = 'scoped memory for mlp_forward.1']
    #allocation5 [shape = 'u8[4096]{0}', space=vmem, size = 0x1000, scoped, tag = 'output window, operand 0, single buffered']
    %12 = vsyncpa [#allocation3], 0
    %13 = vsyncpa [#allocation4], 0
    // Predicated region
    $region2: #{mlp_forward.1} parent=1 // pred_check
      _
    $region3: #{mlp_forward.1} parent=1 // pred_check_branch
      %15 = sbr.rel (0) target = $region5
    $region4: #{mlp_forward.1} parent=1 // pred_region
      _
    $region5: #{mlp_forward.1} parent=1 // pred_fallthru
      _
    // Predicated region
    $region6: #{mlp_forward.1} parent=1 // pred_check
      _
    $region7: #{mlp_forward.1} parent=1 // pred_check_branch
      %17 = sbr.rel (0) target = $region9
    $region8: #{mlp_forward.1} parent=1 // pred_region
      %19 = vsyncadd [#allocation3], 0
      %s20 = sshll.u32 %s1, 4
      %s21 = int_to_ptr.hbm [resolvable:$true] %s20
      %s22 = sshll.u32 [#allocation2], 4
      %s23 = int_to_ptr.vmem [resolvable:$true] %s22
      %28 = dma.hbm_to_vmem [thread:$0]  %s21, 1024, %s23, [#allocation3], 128, 128, 8
    $region9: #{mlp_forward.1} parent=1 // pred_fallthru
      _
    // Predicated region
    $region10: #{mlp_forward.1} parent=1 // pred_check
      _
    $region11: #{mlp_forward.1} parent=1 // pred_check_branch
      %30 = sbr.rel (0) target = $region13
    $region12: #{mlp_forward.1} parent=1 // pred_region
      _
    $region13: #{mlp_forward.1} parent=1 // pred_fallthru
      _
    // Predicated region
    $region14: #{mlp_forward.1} parent=1 // pred_check
      _
    $region15: #{mlp_forward.1} parent=1 // pred_check_branch
      %32 = sbr.rel (0) target = $region17
    $region16: #{mlp_forward.1} parent=1 // pred_region
      _
    $region17: #{mlp_forward.1} parent=1 // pred_fallthru
      _
    // Predicated region
    $region18: #{mlp_forward.1} parent=1 // pred_check
      _
    $region19: #{mlp_forward.1} parent=1 // pred_check_branch
      %34 = sbr.rel (0) target = $region21
    $region20: #{mlp_forward.1} parent=1 // pred_region
      _
    $region21: #{mlp_forward.1} parent=1 // pred_fallthru
      _
    // Predicated region
    $region22: #{mlp_forward.1} parent=1 // pred_check
      _
    $region23: #{mlp_forward.1} parent=1 // pred_check_branch
      %36 = sbr.rel (0) target = $region25
    $region24: #{mlp_forward.1} parent=1 // pred_region
      _
    $region25: #{mlp_forward.1} parent=1 // pred_fallthru
      _
    // Predicated region
    $region26: #{mlp_forward.1} parent=1 // pred_check
      _
    $region27: #{mlp_forward.1} parent=1 // pred_check_branch
      %38 = sbr.rel (0) target = $region29
    $region28: #{mlp_forward.1} parent=1 // pred_region
      _
    $region29: #{mlp_forward.1} parent=1 // pred_fallthru
      _
    // Predicated region
    $region30: #{mlp_forward.1} parent=1 // pred_check
      _
    $region31: #{mlp_forward.1} parent=1 // pred_check_branch
      %40 = sbr.rel (0) target = $region33
    $region32: #{mlp_forward.1} parent=1 // pred_region
      %42 = dma.done [#allocation3], 1024
    $region33: #{mlp_forward.1} parent=1 // pred_fallthru
      _
    %v43 = vld [vmem:[#allocation2] sm:$0xff]
    %v44 = vld [vmem:[#allocation2 + $0x8] sm:$0xff]
    %v45 = vld [vmem:[#allocation2 + $0x10] sm:$0xff]
    %v46 = vld [vmem:[#allocation2 + $0x18] sm:$0xff]
    %v47 = vld [vmem:[#allocation2 + $0x20] sm:$0xff]
    %v48 = vld [vmem:[#allocation2 + $0x28] sm:$0xff]
    %v49 = vld [vmem:[#allocation2 + $0x30] sm:$0xff]
    %v50 = vld [vmem:[#allocation2 + $0x38] sm:$0xf]
    %v51 = vld [vmem:[%s0] sm:$0xff]
    %v52 = vld [vmem:[%s2] sm:$0x1]
    %v54 = vperm.slane %v52, 0
    %vm56 = vcmask 490496
    %v58 = vsel %vm56, %v51, 0
    %vm60 = vcmask 1043456
    %v62 = vsel %vm60, %v50, 0
    %64 = vmatpush.msra.mxu0 0.0
    %65 = vmatpush.msra.mxu0 0.0
    %66 = vmatpush.msra.mxu0 0.0
    %67 = vmatpush.msra.mxu0 0.0
    %68 = vmatpush.msra.mxu0 0.0
    %69 = vmatpush.msra.mxu0 0.0
    %70 = vmatpush.msra.mxu0 0.0
    %71 = vmatpush.msra.mxu0 0.0
    %72 = vmatpush.msra.mxu0 %v62
    %73 = vmatpush.msra.mxu0 %v49
    %74 = vmatpush.msra.mxu0 %v48
    %75 = vmatpush.msra.mxu0 %v47
    %76 = vmatpush.msra.mxu0 %v46
    %77 = vmatpush.msra.mxu0 %v45
    %78 = vmatpush.msra.mxu0 %v44
    %79 = vmatpush.msra.mxu0 %v43
    %80 = vmatmul.f32.gmra.mxu0 %v58
    %v81 = vpop.f32.mrf.mxu0
    %v82 = vadd.f32 %v54, %v81
    %83 = vdwg.mxu0
    %v84 = vmax.f32 %v82, 0.0
    %v85 = vld [vmem:[%s3] sm:$0xff]
    %v86 = vld [vmem:[%s3 + $0x8] sm:$0xff]
    %v87 = vld [vmem:[%s3 + $0x10] sm:$0xff]
    %v88 = vld [vmem:[%s3 + $0x18] sm:$0xff]
    %v89 = vld [vmem:[%s3 + $0x20] sm:$0xff]
    %v90 = vld [vmem:[%s3 + $0x28] sm:$0xff]
    %v91 = vld [vmem:[%s3 + $0x30] sm:$0xff]
    %v92 = vld [vmem:[%s3 + $0x38] sm:$0xff]
    %v93 = vld [vmem:[%s3 + $0x40] sm:$0xff]
    %v94 = vld [vmem:[%s3 + $0x48] sm:$0xff]
    %v95 = vld [vmem:[%s3 + $0x50] sm:$0xff]
    %v96 = vld [vmem:[%s3 + $0x58] sm:$0xff]
    %v97 = vld [vmem:[%s3 + $0x60] sm:$0xff]
    %v98 = vld [vmem:[%s3 + $0x68] sm:$0xff]
    %v99 = vld [vmem:[%s3 + $0x70] sm:$0xff]
    %v100 = vld [vmem:[%s3 + $0x78] sm:$0xff]
    %v101 = vld [vmem:[%s4] sm:$0x1]
    %v103 = vperm.slane %v101, 0
    %105 = vmatpush.msra.mxu0 %v100
    %106 = vmatpush.msra.mxu0 %v99
    %107 = vmatpush.msra.mxu0 %v98
    %108 = vmatpush.msra.mxu0 %v97
    %109 = vmatpush.msra.mxu0 %v96
    %110 = vmatpush.msra.mxu0 %v95
    %111 = vmatpush.msra.mxu0 %v94
    %112 = vmatpush.msra.mxu0 %v93
    %113 = vmatpush.msra.mxu0 %v92
    %114 = vmatpush.msra.mxu0 %v91
    %115 = vmatpush.msra.mxu0 %v90
    %116 = vmatpush.msra.mxu0 %v89
    %117 = vmatpush.msra.mxu0 %v88
    %118 = vmatpush.msra.mxu0 %v87
    %119 = vmatpush.msra.mxu0 %v86
    %120 = vmatpush.msra.mxu0 %v85
    %121 = vmatmul.f32.gmra.mxu0 %v84
    %v122 = vpop.f32.mrf.mxu0
    %v123 = vadd.f32 %v103, %v122
    %124 = vdwg.mxu0
    %v125 = vmax.f32 %v123, 0.0
    %v126 = vld [vmem:[%s5] sm:$0xff]
    %v127 = vld [vmem:[%s5 + $0x8] sm:$0xff]
    %v128 = vld [vmem:[%s5 + $0x10] sm:$0xff]
    %v129 = vld [vmem:[%s5 + $0x18] sm:$0xff]
    %v130 = vld [vmem:[%s5 + $0x20] sm:$0xff]
    %v131 = vld [vmem:[%s5 + $0x28] sm:$0xff]
    %v132 = vld [vmem:[%s5 + $0x30] sm:$0xff]
    %v133 = vld [vmem:[%s5 + $0x38] sm:$0xff]
    %v134 = vld [vmem:[%s5 + $0x40] sm:$0xff]
    %v135 = vld [vmem:[%s5 + $0x48] sm:$0xff]
    %v136 = vld [vmem:[%s5 + $0x50] sm:$0xff]
    %v137 = vld [vmem:[%s5 + $0x58] sm:$0xff]
    %v138 = vld [vmem:[%s5 + $0x60] sm:$0xff]
    %v139 = vld [vmem:[%s5 + $0x68] sm:$0xff]
    %v140 = vld [vmem:[%s5 + $0x70] sm:$0xff]
    %v141 = vld [vmem:[%s5 + $0x78] sm:$0xff]
    %v142 = vld [vmem:[%s6] sm:$0x1]
    %v144 = vperm.slane %v142, 0
    %146 = vmatpush.msra.mxu0 %v141
    %147 = vmatpush.msra.mxu0 %v140
    %148 = vmatpush.msra.mxu0 %v139
    %149 = vmatpush.msra.mxu0 %v138
    %150 = vmatpush.msra.mxu0 %v137
    %151 = vmatpush.msra.mxu0 %v136
    %152 = vmatpush.msra.mxu0 %v135
    %153 = vmatpush.msra.mxu0 %v134
    %154 = vmatpush.msra.mxu0 %v133
    %155 = vmatpush.msra.mxu0 %v132
    %156 = vmatpush.msra.mxu0 %v131
    %157 = vmatpush.msra.mxu0 %v130
    %158 = vmatpush.msra.mxu0 %v129
    %159 = vmatpush.msra.mxu0 %v128
    %160 = vmatpush.msra.mxu0 %v127
    %161 = vmatpush.msra.mxu0 %v126
    %162 = vmatmul.f32.gmra.mxu0 %v125
    %v163 = vpop.f32.mrf.mxu0
    %v164 = vadd.f32 %v144, %v163
    %165 = vdwg.mxu0
    %vm166 = vcmask 80896
    %167 = vst.msk [vmem:[#allocation5] sm:$0xff] %vm166, %v164
    // Predicated region
    $region34: #{mlp_forward.1} parent=1 // pred_check
      _
    $region35: #{mlp_forward.1} parent=1 // pred_check_branch
      %169 = sbr.rel (0) target = $region37
    $region36: #{mlp_forward.1} parent=1 // pred_region
      %171 = vsyncadd [#allocation4], 96
      %s172 = sshll.u32 [#allocation5], 4
      %s173 = int_to_ptr.vmem [resolvable:$true] %s172
      %s174 = sshll.u32 %s7, 4
      %s175 = int_to_ptr.hbm [resolvable:$true] %s174
      %180 = dma.vmem_to_hbm [thread:$0]  %s173, 32, %s175, [#allocation4], 32, 32, 2
    $region37: #{mlp_forward.1} parent=1 // pred_fallthru
      _
    // Predicated region
    $region38: #{mlp_forward.1} parent=1 // pred_check
      _
    $region39: #{mlp_forward.1} parent=1 // pred_check_branch
      %182 = sbr.rel (0) target = $region41
    $region40: #{mlp_forward.1} parent=1 // pred_region
      %184 = dma.done [#allocation4], 128
    $region41: #{mlp_forward.1} parent=1 // pred_fallthru
      _
    %185 = vsyncpa [#allocation3], 1
    %186 = vsyncpa [#allocation4], 1

</llo_original>
